<compile_context>
chip_gen: v5e
topology: v5e:2x2
jax: 0.10.0
libtpu: 0.0.40
codegen_flags: <defaults>
</compile_context>

<pallas_src>
import functools

import jax
import jax.numpy as jnp
from jax.experimental import pallas as pl
from jax.experimental.pallas import tpu as pltpu


def _round_up(x, m):
    return (x + m - 1) // m * m


def _default_mish_dtype():
    """bf16 transcendentals on chips with a bf16 EUP (v6e/v7x); f32 otherwise."""
    try:
        kind = jax.devices()[0].device_kind.lower()
    except Exception:
        return jnp.dtype(jnp.float32)
    if any(tag in kind for tag in ("v2", "v3", "v4", "v5")):
        return jnp.dtype(jnp.float32)      # no bf16 VPU/EUP -> keep f32 math
    return jnp.dtype(jnp.bfloat16)


def _choose_block_m(batch):
    if batch <= 32:
        # One block covering the whole batch (block dim == array dim is always legal).
        return int(batch)
    # >=4 grid steps (>=2 per TensorCore on v7x), multiples of 16, capped at 1024
    # rows so the double-buffered VMEM footprint stays ~6 MiB on every generation.
    return int(min(1024, max(16, _round_up(pl.cdiv(batch, 4), 16))))


def feature_projector_kernel(x_ref, w1_ref, b1_ref, w2_ref, b2_ref, o_ref, *,
                             mish_dtype):
    # x_ref:  (bm, K)  f32      w1_ref: (K, E) bf16   b1_ref: (1, E) f32
    # w2_ref: (E, E)   bf16     b2_ref: (1, E) f32    o_ref:  (bm, E) out_dtype
    # First GEMM: cast the x tile to bf16 in-VMEM, accumulate in f32 on the MXU.
    h = jnp.dot(x_ref[...].astype(jnp.bfloat16), w1_ref[...],
                preferred_element_type=jnp.float32)
    h = h + b1_ref[...]

    # Mish epilogue.  mish(x) = x * tanh(softplus(x)); with e = exp(x):
    #   tanh(log1p(e)) = e*(e+2) / (e*(e+2) + 2)
    # -> one exp + one approx reciprocal.  exp/muls run in `mish_dtype` (bf16 on
    # v6e/v7x for the bf16 EUP); the approx EUP reciprocal stays on its f32 path.
    hm = h.astype(mish_dtype)
    e = jnp.exp(jnp.minimum(hm, jnp.asarray(20.0, mish_dtype)))  # clamp avoids inf
    t = e * (e + jnp.asarray(2.0, mish_dtype))
    inv = pl.reciprocal(t.astype(jnp.float32) + 2.0, approx=True)
    mish = jnp.where(h > 20.0, h, h * t.astype(jnp.float32) * inv)  # mish(x)~=x, x>20

    # Second GEMM in bf16 with f32 accumulation.
    out = jnp.dot(mish.astype(jnp.bfloat16), w2_ref[...],
                  preferred_element_type=jnp.float32)
    out = out + b2_ref[...]
    o_ref[...] = out.astype(o_ref.dtype)


@functools.partial(jax.jit, static_argnames=("block_m", "out_dtype", "mish_dtype"))
def _feature_projector_impl(x, w1, b1, w2, b2, *, block_m, out_dtype, mish_dtype):
    B, K = x.shape
    E = w1.shape[1]
    grid = (pl.cdiv(B, block_m),)

    out_bytes = jnp.dtype(out_dtype).itemsize
    cost = pl.CostEstimate(
        flops=2 * B * (K * E + E * E),
        transcendentals=2 * B * E,                       # exp + reciprocal / element
        bytes_accessed=(B * K * 4)                       # f32 x read
                       + (K * E * 2) + (E * E * 2)       # bf16 resident weights
                       + (2 * E * 4)                     # f32 biases
                       + (B * E * out_bytes),            # output write
    )

    kernel = functools.partial(feature_projector_kernel, mish_dtype=mish_dtype)
    return pl.pallas_call(
        kernel,
        out_shape=jax.ShapeDtypeStruct((B, E), out_dtype),
        grid_spec=pltpu.PrefetchScalarGridSpec(
            num_scalar_prefetch=0,
            grid=grid,
            in_specs=[
                pl.BlockSpec((block_m, K), lambda i: (i, 0)),  # x: full-K block
                pl.BlockSpec((K, E), lambda i: (0, 0)),        # w1 (resident)
                pl.BlockSpec((1, E), lambda i: (0, 0)),        # b1 (resident)
                pl.BlockSpec((E, E), lambda i: (0, 0)),        # w2 (resident)
                pl.BlockSpec((1, E), lambda i: (0, 0)),        # b2 (resident)
            ],
            out_specs=pl.BlockSpec((block_m, E), lambda i: (i, 0)),
        ),
        compiler_params=pltpu.CompilerParams(
            dimension_semantics=("parallel",)),
        cost_estimate=cost,
    )(x, w1, b1, w2, b2)


def prepare_feature_projector_params(w1, b1, w2, b2):
    """One-time param prep (do this OUTSIDE the hot path): bf16 MXU weights,
    f32 (1, E) biases.  w1: [input_dim, E], w2: [E, E] (already transposed from
    the PyTorch [out, in] layout)."""
    E = w1.shape[1]
    return (jnp.asarray(w1, jnp.bfloat16),
            jnp.asarray(b1, jnp.float32).reshape(1, E),
            jnp.asarray(w2, jnp.bfloat16),
            jnp.asarray(b2, jnp.float32).reshape(1, E))


def feature_projector(x, params, *, out_dtype=jnp.float32, mish_dtype=None):
    """x: [B, input_dim] f32; params: output of prepare_feature_projector_params."""
    w1, b1, w2, b2 = params
    if mish_dtype is None:
        mish_dtype = _default_mish_dtype()
    else:
        mish_dtype = jnp.dtype(mish_dtype)
    block_m = _choose_block_m(x.shape[0])
    return _feature_projector_impl(x, w1, b1, w2, b2, block_m=block_m,
                                   out_dtype=jnp.dtype(out_dtype),
                                   mish_dtype=mish_dtype)


def reference_projector(x, w1, b1, w2, b2):
    h = x @ w1 + b1
    h = h * jnp.tanh(jax.nn.softplus(h))
    return h @ w2 + b2


if __name__ == "__main__":
    input_dim, embed_dim = 80, 512   # module defaults

    key = jax.random.PRNGKey(0)
    kx, k1, kb1, k2, kb2 = jax.random.split(key, 5)

    # Deterministic synthetic parameters (PyTorch-Linear-like uniform init).
    bound1 = 1.0 / (input_dim ** 0.5)
    bound2 = 1.0 / (embed_dim ** 0.5)
    w1 = jax.random.uniform(k1, (input_dim, embed_dim), jnp.float32, -bound1, bound1)
    b1 = jax.random.uniform(kb1, (embed_dim,), jnp.float32, -bound1, bound1)
    w2 = jax.random.uniform(k2, (embed_dim, embed_dim), jnp.float32, -bound2, bound2)
    b2 = jax.random.uniform(kb2, (embed_dim,), jnp.float32, -bound2, bound2)

    # One-time parameter preparation (bf16 weights), outside the per-call path.
    params = jax.block_until_ready(prepare_feature_projector_params(w1, b1, w2, b2))

    ok = True
    # batch=2: single full-batch block; batch=8: aligned single block;
    # batch=100: multi-step parallel grid with a masked partial last block.
    for batch in (2, 8, 100):
        x = jax.random.normal(jax.random.fold_in(kx, batch),
                              (batch, input_dim), dtype=jnp.float32)

        out = jax.block_until_ready(feature_projector(x, params))
        ref = reference_projector(x, w1, b1, w2, b2)

        assert out.shape == (batch, embed_dim) and out.dtype == jnp.float32
        # bf16 matmul inputs + approx reciprocal (+ bf16 exp on v6e/v7x)
        # -> relaxed tolerance vs the f32 reference.
        ok &= bool(jnp.allclose(out, ref, atol=3e-2, rtol=3e-2))

    # Optional bf16 output path (halves the dominant HBM write stream).
    out_bf16 = jax.block_until_ready(
        feature_projector(x, params, out_dtype=jnp.bfloat16))
    assert out_bf16.dtype == jnp.bfloat16 and out_bf16.shape == ref.shape
    ok &= bool(jnp.allclose(out_bf16.astype(jnp.float32), ref, atol=8e-2, rtol=8e-2))

    assert ok
    print("KERNEL_OK")
</pallas_src>

<mosaic_0001>
module attributes {stable_mosaic.version = 11 : i64} {
  func.func @feature_projector_kernel(%arg0: i32, %arg1: memref<2x80xf32, #tpu.memory_space<vmem>>, %arg2: memref<80x512xbf16, #tpu.memory_space<vmem>>, %arg3: memref<1x512xf32, #tpu.memory_space<vmem>>, %arg4: memref<512x512xbf16, #tpu.memory_space<vmem>>, %arg5: memref<1x512xf32, #tpu.memory_space<vmem>>, %arg6: memref<2x512xf32, #tpu.memory_space<vmem>>) attributes {dimension_semantics = [#tpu.dimension_semantics<parallel>], iteration_bounds = array<i64: 1>, scalar_prefetch = 0 : i64, scratch_operands = 0 : i64, tpu.core_type = #tpu.core_type<tc>, window_params = [{transform_indices = @transform_0, window_bounds = array<i64: 2, 80>}, {pipeline_mode = #tpu.pipeline_mode<synchronous>, transform_indices = @transform_1, window_bounds = array<i64: 80, 512>}, {pipeline_mode = #tpu.pipeline_mode<synchronous>, transform_indices = @transform_2, window_bounds = array<i64: 1, 512>}, {pipeline_mode = #tpu.pipeline_mode<synchronous>, transform_indices = @transform_3, window_bounds = array<i64: 512, 512>}, {pipeline_mode = #tpu.pipeline_mode<synchronous>, transform_indices = @transform_4, window_bounds = array<i64: 1, 512>}, {transform_indices = @transform_5, window_bounds = array<i64: 2, 512>}]} {
    %c0 = arith.constant 0 : index
    %c0_0 = arith.constant 0 : index
    %0 = vector.load %arg1[%c0, %c0_0] : memref<2x80xf32, #tpu.memory_space<vmem>>, vector<2x80xf32>
    %1 = arith.truncf %0 : vector<2x80xf32> to vector<2x80xbf16>
    %c0_1 = arith.constant 0 : index
    %c0_2 = arith.constant 0 : index
    %2 = vector.load %arg2[%c0_1, %c0_2] : memref<80x512xbf16, #tpu.memory_space<vmem>>, vector<80x512xbf16>
    %cst = arith.constant dense<0.000000e+00> : vector<2x512xf32>
    %3 = tpu.matmul %1, %2, %cst {dimension_numbers = #tpu.dot_dimension_numbers<[1], [0], [0], [1], [0, 0, 1, 1], [], []>} : vector<2x80xbf16>, vector<80x512xbf16>, vector<2x512xf32> -> vector<2x512xf32>
    %c0_3 = arith.constant 0 : index
    %c0_4 = arith.constant 0 : index
    %4 = vector.load %arg3[%c0_3, %c0_4] : memref<1x512xf32, #tpu.memory_space<vmem>>, vector<1x512xf32>
    %5 = vector.broadcast %4 : vector<1x512xf32> to vector<2x512xf32>
    %6 = arith.addf %3, %5 : vector<2x512xf32>
    %7 = arith.truncf %6 : vector<2x512xf32> to vector<2x512xbf16>
    %cst_5 = arith.constant 2.000000e+01 : bf16
    %8 = vector.broadcast %cst_5 : bf16 to vector<2x512xbf16>
    %9 = arith.minimumf %7, %8 : vector<2x512xbf16>
    %10 = math.exp %9 : vector<2x512xbf16>
    %cst_6 = arith.constant 2.000000e+00 : bf16
    %11 = vector.broadcast %cst_6 : bf16 to vector<2x512xbf16>
    %12 = arith.addf %10, %11 : vector<2x512xbf16>
    %13 = arith.mulf %10, %12 : vector<2x512xbf16>
    %14 = arith.extf %13 : vector<2x512xbf16> to vector<2x512xf32>
    %cst_7 = arith.constant 2.000000e+00 : f32
    %15 = vector.broadcast %cst_7 : f32 to vector<2x512xf32>
    %16 = arith.addf %14, %15 : vector<2x512xf32>
    %17 = tpu.reciprocal %16 {approx = true} : vector<2x512xf32> -> vector<2x512xf32>
    %cst_8 = arith.constant 2.000000e+01 : f32
    %18 = vector.broadcast %cst_8 : f32 to vector<2x512xf32>
    %19 = arith.cmpf ogt, %6, %18 : vector<2x512xf32>
    %20 = arith.extf %13 : vector<2x512xbf16> to vector<2x512xf32>
    %21 = arith.mulf %6, %20 : vector<2x512xf32>
    %22 = arith.mulf %21, %17 : vector<2x512xf32>
    %23 = arith.select %19, %6, %22 : vector<2x512xi1>, vector<2x512xf32>
    %24 = arith.truncf %23 : vector<2x512xf32> to vector<2x512xbf16>
    %c0_9 = arith.constant 0 : index
    %c0_10 = arith.constant 0 : index
    %25 = vector.load %arg4[%c0_9, %c0_10] : memref<512x512xbf16, #tpu.memory_space<vmem>>, vector<512x512xbf16>
    %cst_11 = arith.constant dense<0.000000e+00> : vector<2x512xf32>
    %26 = tpu.matmul %24, %25, %cst_11 {dimension_numbers = #tpu.dot_dimension_numbers<[1], [0], [0], [1], [0, 0, 1, 1], [], []>} : vector<2x512xbf16>, vector<512x512xbf16>, vector<2x512xf32> -> vector<2x512xf32>
    %c0_12 = arith.constant 0 : index
    %c0_13 = arith.constant 0 : index
    %27 = vector.load %arg5[%c0_12, %c0_13] : memref<1x512xf32, #tpu.memory_space<vmem>>, vector<1x512xf32>
    %28 = vector.broadcast %27 : vector<1x512xf32> to vector<2x512xf32>
    %29 = arith.addf %26, %28 : vector<2x512xf32>
    %c0_14 = arith.constant 0 : index
    %c0_15 = arith.constant 0 : index
    %30 = vector.load %arg6[%c0_14, %c0_15] : memref<2x512xf32, #tpu.memory_space<vmem>>, vector<2x512xf32>
    tpu.vector_store %arg6[%c0_14, %c0_15], %29 {strides = array<i32>} : memref<2x512xf32, #tpu.memory_space<vmem>>, vector<2x512xf32>,
    return
  }
  func.func @transform_0(%arg0: i32) -> (i32, i32) {
    %c0_i32 = arith.constant 0 : i32
    %c0_i32_0 = arith.constant 0 : i32
    return %arg0, %c0_i32 : i32, i32
  }
  func.func @transform_1(%arg0: i32) -> (i32, i32) {
    %c0_i32 = arith.constant 0 : i32
    %c0_i32_0 = arith.constant 0 : i32
    %c0_i32_1 = arith.constant 0 : i32
    return %c0_i32, %c0_i32_0 : i32, i32
  }
  func.func @transform_2(%arg0: i32) -> (i32, i32) {
    %c0_i32 = arith.constant 0 : i32
    %c0_i32_0 = arith.constant 0 : i32
    %c0_i32_1 = arith.constant 0 : i32
    return %c0_i32, %c0_i32_0 : i32, i32
  }
  func.func @transform_3(%arg0: i32) -> (i32, i32) {
    %c0_i32 = arith.constant 0 : i32
    %c0_i32_0 = arith.constant 0 : i32
    %c0_i32_1 = arith.constant 0 : i32
    return %c0_i32, %c0_i32_0 : i32, i32
  }
  func.func @transform_4(%arg0: i32) -> (i32, i32) {
    %c0_i32 = arith.constant 0 : i32
    %c0_i32_0 = arith.constant 0 : i32
    %c0_i32_1 = arith.constant 0 : i32
    return %c0_i32, %c0_i32_0 : i32, i32
  }
  func.func @transform_5(%arg0: i32) -> (i32, i32) {
    %c0_i32 = arith.constant 0 : i32
    %c0_i32_0 = arith.constant 0 : i32
    return %arg0, %c0_i32 : i32, i32
  }
}

</mosaic_0001>

<llo_original>
// kernel: _feature_projector_impl.1
$region0: #{_feature_projector_impl.1}
  #allocation0 [shape = 'u32[]', space=smem, size = 0x4, offset = 0x4, fixed_abs, tag = 'smem constant byte address 0x4 - core index']
  #allocation1 [shape = 'u32[72,128]{1,0:T(1,128)}', space=vmem, size = 0x9000, scoped, tag = 'internal scratch']
  %s0 = inlined_call_operand.hbm [shape: f32[2,80], index: 0, kind: input, shape index: {}]
  %s1 = inlined_call_operand.hbm [shape: bf16[80,512], index: 1, kind: input, shape index: {}]
  %s2 = inlined_call_operand.hbm [shape: f32[1,512], index: 2, kind: input, shape index: {}]
  %s3 = inlined_call_operand.hbm [shape: bf16[512,512], index: 3, kind: input, shape index: {}]
  %s4 = inlined_call_operand.hbm [shape: f32[1,512], index: 4, kind: input, shape index: {}]
  %s5 = inlined_call_operand.hbm [shape: f32[2,512], index: 5, kind: output, shape index: {}]
  %s6 = sld [smem:[#allocation0]]
  $region50: #{_feature_projector_impl.1} parent=0
    _
  %s8 = ssub.s32 1, %s6
  %s9 = scalar_select 0, %s8, %s6
  $region1: #{_feature_projector_impl.1} parent=0
    #allocation2 [shape = 'u8[1024]{0}', space=vmem, size = 0x400, scoped, tag = 'input window, operand 0, single buffered']
    #allocation3 [shape = 's32[1]{0}', space=sflag, size = 0x4, scoped, tag = 'scoped memory for _feature_projector_impl.1']
    #allocation4 [shape = 's32[1]{0}', space=sflag, size = 0x4, scoped, tag = 'scoped memory for _feature_projector_impl.1']
    #allocation5 [shape = 'u8[81920]{0}', space=vmem, size = 0x14000, scoped, tag = 'input window, operand 1, single buffered']
    #allocation6 [shape = 's32[1]{0}', space=sflag, size = 0x4, scoped, tag = 'scoped memory for _feature_projector_impl.1']
    #allocation7 [shape = 'u8[2048]{0}', space=vmem, size = 0x800, scoped, tag = 'input window, operand 2, single buffered']
    #allocation8 [shape = 'u8[524288]{0}', space=vmem, size = 0x80000, scoped, tag = 'input window, operand 3, single buffered']
    #allocation9 [shape = 's32[1]{0}', space=sflag, size = 0x4, scoped, tag = 'scoped memory for _feature_projector_impl.1']
    #allocation10 [shape = 'u8[2048]{0}', space=vmem, size = 0x800, scoped, tag = 'input window, operand 4, single buffered']
    #allocation11 [shape = 'u8[4096]{0}', space=vmem, size = 0x1000, scoped, tag = 'output window, operand 0, single buffered']
    %10 = vsyncpa [#allocation3], 0
    %11 = vsyncpa [#allocation6], 0
    %12 = vsyncpa [#allocation9], 0
    %13 = vsyncpa [#allocation4], 0
    // Predicated region
    $region2: #{_feature_projector_impl.1} parent=1 // pred_check
      _
    $region3: #{_feature_projector_impl.1} parent=1 // pred_check_branch
      %15 = sbr.rel (0) target = $region5
    $region4: #{_feature_projector_impl.1} parent=1 // pred_region
      %17 = vsyncadd [#allocation3], 0
      %s19 = sshll.u32 %s0, 4
      %s20 = int_to_ptr.hbm [resolvable:$true] %s19
      %s21 = sshll.u32 [#allocation2], 4
      %s22 = int_to_ptr.vmem [resolvable:$true] %s21
      %24 = dma.hbm_to_vmem [thread:$0]  %s20, 32, %s22, [#allocation3]
    $region5: #{_feature_projector_impl.1} parent=1 // pred_fallthru
      _
    // Predicated region
    $region6: #{_feature_projector_impl.1} parent=1 // pred_check
      _
    $region7: #{_feature_projector_impl.1} parent=1 // pred_check_branch
      %26 = sbr.rel (0) target = $region9
    $region8: #{_feature_projector_impl.1} parent=1 // pred_region
      %28 = vsyncadd [#allocation6], 0
      %s29 = sshll.u32 %s1, 4
      %s30 = int_to_ptr.hbm [resolvable:$true] %s29
      %s31 = sshll.u32 [#allocation5], 4
      %s32 = int_to_ptr.vmem [resolvable:$true] %s31
      %37 = dma.hbm_to_vmem [thread:$0]  %s30, 2560, %s32, [#allocation6], 256, 256, 16
    $region9: #{_feature_projector_impl.1} parent=1 // pred_fallthru
      _
    // Predicated region
    $region10: #{_feature_projector_impl.1} parent=1 // pred_check
      _
    $region11: #{_feature_projector_impl.1} parent=1 // pred_check_branch
      %39 = sbr.rel (0) target = $region13
    $region12: #{_feature_projector_impl.1} parent=1 // pred_region
      %41 = vsyncadd [#allocation6], 0
      %s43 = sshll.u32 %s2, 4
      %s44 = int_to_ptr.hbm [resolvable:$true] %s43
      %s45 = sshll.u32 [#allocation7], 4
      %s46 = int_to_ptr.vmem [resolvable:$true] %s45
      %48 = dma.hbm_to_vmem [thread:$0]  %s44, 64, %s46, [#allocation6]
    $region13: #{_feature_projector_impl.1} parent=1 // pred_fallthru
      _
    // Predicated region
    $region14: #{_feature_projector_impl.1} parent=1 // pred_check
      _
    $region15: #{_feature_projector_impl.1} parent=1 // pred_check_branch
      %50 = sbr.rel (0) target = $region17
    $region16: #{_feature_projector_impl.1} parent=1 // pred_region
      %52 = vsyncadd [#allocation9], 0
      %s53 = sshll.u32 %s3, 4
      %s54 = int_to_ptr.hbm [resolvable:$true] %s53
      %s55 = sshll.u32 [#allocation8], 4
      %s56 = int_to_ptr.vmem [resolvable:$true] %s55
      %61 = dma.hbm_to_vmem [thread:$0]  %s54, 16384, %s56, [#allocation9], 256, 256, 16
    $region17: #{_feature_projector_impl.1} parent=1 // pred_fallthru
      _
    // Predicated region
    $region18: #{_feature_projector_impl.1} parent=1 // pred_check
      _
    $region19: #{_feature_projector_impl.1} parent=1 // pred_check_branch
      %63 = sbr.rel (0) target = $region21
    $region20: #{_feature_projector_impl.1} parent=1 // pred_region
      %65 = vsyncadd [#allocation9], 0
      %s67 = sshll.u32 %s4, 4
      %s68 = int_to_ptr.hbm [resolvable:$true] %s67
      %s69 = sshll.u32 [#allocation10], 4
      %s70 = int_to_ptr.vmem [resolvable:$true] %s69
      %72 = dma.hbm_to_vmem [thread:$0]  %s68, 64, %s70, [#allocation9]
    $region21: #{_feature_projector_impl.1} parent=1 // pred_fallthru
      _
    // Predicated region
    $region22: #{_feature_projector_impl.1} parent=1 // pred_check
      _
    $region23: #{_feature_projector_impl.1} parent=1 // pred_check_branch
      %74 = sbr.rel (0) target = $region25
    $region24: #{_feature_projector_impl.1} parent=1 // pred_region
      %76 = dma.done [#allocation3], 32
    $region25: #{_feature_projector_impl.1} parent=1 // pred_fallthru
      _
    // Predicated region
    $region26: #{_feature_projector_impl.1} parent=1 // pred_check
      _
    $region27: #{_feature_projector_impl.1} parent=1 // pred_check_branch
      %78 = sbr.rel (0) target = $region29
    $region28: #{_feature_projector_impl.1} parent=1 // pred_region
      %80 = dma.done [#allocation6], 2560
    $region29: #{_feature_projector_impl.1} parent=1 // pred_fallthru
      _
    // Predicated region
    $region30: #{_feature_projector_impl.1} parent=1 // pred_check
      _
    $region31: #{_feature_projector_impl.1} parent=1 // pred_check_branch
      %82 = sbr.rel (0) target = $region33
    $region32: #{_feature_projector_impl.1} parent=1 // pred_region
      %84 = dma.done [#allocation6], 64
    $region33: #{_feature_projector_impl.1} parent=1 // pred_fallthru
      _
    // Predicated region
    $region34: #{_feature_projector_impl.1} parent=1 // pred_check
      _
    $region35: #{_feature_projector_impl.1} parent=1 // pred_check_branch
      %86 = sbr.rel (0) target = $region37
    $region36: #{_feature_projector_impl.1} parent=1 // pred_region
      %88 = dma.done [#allocation9], 16384
    $region37: #{_feature_projector_impl.1} parent=1 // pred_fallthru
      _
    // Predicated region
    $region38: #{_feature_projector_impl.1} parent=1 // pred_check
      _
    $region39: #{_feature_projector_impl.1} parent=1 // pred_check_branch
      %90 = sbr.rel (0) target = $region41
    $region40: #{_feature_projector_impl.1} parent=1 // pred_region
      %92 = dma.done [#allocation9], 64
    $region41: #{_feature_projector_impl.1} parent=1 // pred_fallthru
      _
    %v94 = vld [vmem:[#allocation2] sm:$0x3]
    %v95 = vpack.c.bf16 %v94, %v94
    %v96 = vld [vmem:[#allocation5] sm:$0xff]
    %v97 = vld [vmem:[#allocation5 + $0x8] sm:$0xff]
    %v98 = vld [vmem:[#allocation5 + $0x10] sm:$0xff]
    %v99 = vld [vmem:[#allocation5 + $0x18] sm:$0xff]
    %v100 = vld [vmem:[#allocation5 + $0x20] sm:$0xff]
    %v101 = vld [vmem:[#allocation5 + $0x28] sm:$0xff]
    %v102 = vld [vmem:[#allocation5 + $0x30] sm:$0xff]
    %v103 = vld [vmem:[#allocation5 + $0x38] sm:$0xff]
    %v104 = vld [vmem:[#allocation5 + $0x40] sm:$0xff]
    %v105 = vld [vmem:[#allocation5 + $0x48] sm:$0xff]
    %v106 = vld [vmem:[#allocation5 + $0x50] sm:$0xff]
    %v107 = vld [vmem:[#allocation5 + $0x58] sm:$0xff]
    %v108 = vld [vmem:[#allocation5 + $0x60] sm:$0xff]
    %v109 = vld [vmem:[#allocation5 + $0x68] sm:$0xff]
    %v110 = vld [vmem:[#allocation5 + $0x70] sm:$0xff]
    %v111 = vld [vmem:[#allocation5 + $0x78] sm:$0xff]
    %v112 = vld [vmem:[#allocation5 + $0x80] sm:$0xff]
    %v113 = vld [vmem:[#allocation5 + $0x88] sm:$0xff]
    %v114 = vld [vmem:[#allocation5 + $0x90] sm:$0xff]
    %v115 = vld [vmem:[#allocation5 + $0x98] sm:$0xff]
    %v116 = vld [vmem:[#allocation7] sm:$0xf]
    %v118 = vperm.slane %v116, 0
    %v119 = vperm.slane %v116, 1
    %v120 = vperm.slane %v116, 2
    %v121 = vperm.slane %v116, 3
    %v146 = vunpack.c.l.b16 %v96
    %v147 = vunpack.c.h.b16 %v96
    %v148 = vunpack.c.l.b16 %v97
    %v149 = vunpack.c.h.b16 %v97
    %v150 = vunpack.c.l.b16 %v98
    %v151 = vunpack.c.h.b16 %v98
    %v152 = vunpack.c.l.b16 %v99
    %v153 = vunpack.c.h.b16 %v99
    %v154 = vunpack.c.l.b16 %v100
    %v155 = vunpack.c.h.b16 %v100
    %v156 = vunpack.c.l.b16 %v101
    %v157 = vunpack.c.h.b16 %v101
    %v158 = vunpack.c.l.b16 %v102
    %v159 = vunpack.c.h.b16 %v102
    %v160 = vunpack.c.l.b16 %v103
    %v161 = vunpack.c.h.b16 %v103
    %v162 = vunpack.c.l.b16 %v104
    %v163 = vunpack.c.h.b16 %v104
    %v164 = vunpack.c.l.b16 %v105
    %v165 = vunpack.c.h.b16 %v105
    %v166 = vunpack.c.l.b16 %v106
    %v167 = vunpack.c.h.b16 %v106
    %v168 = vunpack.c.l.b16 %v107
    %v169 = vunpack.c.h.b16 %v107
    %v170 = vunpack.c.l.b16 %v108
    %v171 = vunpack.c.h.b16 %v108
    %v172 = vunpack.c.l.b16 %v109
    %v173 = vunpack.c.h.b16 %v109
    %v174 = vunpack.c.l.b16 %v110
    %v175 = vunpack.c.h.b16 %v110
    %v176 = vunpack.c.l.b16 %v111
    %v177 = vunpack.c.h.b16 %v111
    %v178 = vunpack.c.l.b16 %v112
    %v179 = vunpack.c.h.b16 %v112
    %v180 = vunpack.c.l.b16 %v113
    %v181 = vunpack.c.h.b16 %v113
    %v182 = vunpack.c.l.b16 %v114
    %v183 = vunpack.c.h.b16 %v114
    %v184 = vunpack.c.l.b16 %v115
    %v185 = vunpack.c.h.b16 %v115
    %v186 = vpack.c.b16 %v150, %v146
    %v187 = vpack.c.b16 %v151, %v147
    %v188 = vpack.c.b16 %v152, %v148
    %v189 = vpack.c.b16 %v153, %v149
    %v190 = vpack.c.b16 %v158, %v154
    %v191 = vpack.c.b16 %v159, %v155
    %v192 = vpack.c.b16 %v160, %v156
    %v193 = vpack.c.b16 %v161, %v157
    %v194 = vpack.c.b16 %v166, %v162
    %v195 = vpack.c.b16 %v167, %v163
    %v196 = vpack.c.b16 %v168, %v164
    %v197 = vpack.c.b16 %v169, %v165
    %v198 = vpack.c.b16 %v174, %v170
    %v199 = vpack.c.b16 %v175, %v171
    %v200 = vpack.c.b16 %v176, %v172
    %v201 = vpack.c.b16 %v177, %v173
    %v202 = vpack.c.b16 %v182, %v178
    %v203 = vpack.c.b16 %v183, %v179
    %v204 = vpack.c.b16 %v184, %v180
    %v205 = vpack.c.b16 %v185, %v181
    %vm226 = vcmask 654336
    %v228 = vsel %vm226, %v95, 0
    %230 = vmatpush.bf16.msra.mxu0 0
    %231 = vmatpush.bf16.msra.mxu0 0
    %232 = vmatpush.bf16.msra.mxu0 0
    %233 = vmatpush.bf16.msra.mxu0 %v202
    %234 = vmatpush.bf16.msra.mxu0 %v198
    %235 = vmatpush.bf16.msra.mxu0 %v194
    %236 = vmatpush.bf16.msra.mxu0 %v190
    %237 = vmatpush.bf16.msra.mxu0 %v186
    %238 = vmatmul.bf16.gmra.mxu0 %v228
    %v239 = vpop.f32.mrf.mxu0
    %v240 = vadd.f32 %v118, %v239
    %v241 = vpop.f32.mrf.mxu0
    %242 = vdwg.mxu0
    %243 = vmatpush.bf16.msra.mxu0 0
    %244 = vmatpush.bf16.msra.mxu0 0
    %245 = vmatpush.bf16.msra.mxu0 0
    %246 = vmatpush.bf16.msra.mxu0 %v203
    %247 = vmatpush.bf16.msra.mxu0 %v199
    %248 = vmatpush.bf16.msra.mxu0 %v195
    %249 = vmatpush.bf16.msra.mxu0 %v191
    %250 = vmatpush.bf16.msra.mxu0 %v187
    %251 = vmatmul.bf16.gmra.mxu0 %v228
    %v252 = vpop.f32.mrf.mxu0
    %v253 = vadd.f32 %v119, %v252
    %v254 = vpop.f32.mrf.mxu0
    %255 = vdwg.mxu0
    %256 = vmatpush.bf16.msra.mxu0 0
    %257 = vmatpush.bf16.msra.mxu0 0
    %258 = vmatpush.bf16.msra.mxu0 0
    %259 = vmatpush.bf16.msra.mxu0 %v204
    %260 = vmatpush.bf16.msra.mxu0 %v200
    %261 = vmatpush.bf16.msra.mxu0 %v196
    %262 = vmatpush.bf16.msra.mxu0 %v192
    %263 = vmatpush.bf16.msra.mxu0 %v188
    %264 = vmatmul.bf16.gmra.mxu0 %v228
    %v265 = vpop.f32.mrf.mxu0
    %v266 = vadd.f32 %v120, %v265
    %v267 = vpop.f32.mrf.mxu0
    %268 = vdwg.mxu0
    %269 = vmatpush.bf16.msra.mxu0 0
    %270 = vmatpush.bf16.msra.mxu0 0
    %271 = vmatpush.bf16.msra.mxu0 0
    %272 = vmatpush.bf16.msra.mxu0 %v205
    %273 = vmatpush.bf16.msra.mxu0 %v201
    %274 = vmatpush.bf16.msra.mxu0 %v197
    %275 = vmatpush.bf16.msra.mxu0 %v193
    %276 = vmatpush.bf16.msra.mxu0 %v189
    %277 = vmatmul.bf16.gmra.mxu0 %v228
    %v278 = vpop.f32.mrf.mxu0
    %v279 = vadd.f32 %v121, %v278
    %v280 = vpop.f32.mrf.mxu0
    %281 = vdwg.mxu0
    %v282 = vpack.c.bf16 %v253, %v240
    %v283 = vpack.c.bf16 %v279, %v266
    %v284 = vunpack.c.l.bf16 %v282
    %v285 = vunpack.c.h.bf16 %v282
    %v286 = vunpack.c.l.bf16 %v283
    %v287 = vunpack.c.h.bf16 %v283
    %v288 = vmin.f32 %v284, 20.0
    %v289 = vmin.f32 %v285, 20.0
    %v290 = vmin.f32 %v286, 20.0
    %v291 = vmin.f32 %v287, 20.0
    %v292 = vpack.c.bf16 %v289, %v288
    %v293 = vpack.c.bf16 %v291, %v290
    %v294 = vunpack.c.l.bf16 %v292
    %v295 = vunpack.c.h.bf16 %v292
    %v296 = vunpack.c.l.bf16 %v293
    %v297 = vunpack.c.h.bf16 %v293
    %v298 = vmul.f32 %v294, 1.442695
    %v299 = vpow.pop %v298
    %v300 = vmul.f32 %v295, 1.442695
    %v301 = vpow.pop %v300
    %v302 = vmul.f32 %v296, 1.442695
    %v303 = vpow.pop %v302
    %v304 = vmul.f32 %v297, 1.442695
    %v305 = vpow.pop %v304
    %v306 = vpack.c.bf16 %v301, %v299
    %v307 = vpack.c.bf16 %v305, %v303
    %v308 = vunpack.c.l.bf16 %v306
    %v309 = vunpack.c.h.bf16 %v306
    %v310 = vunpack.c.l.bf16 %v307
    %v311 = vunpack.c.h.bf16 %v307
    %v312 = vadd.f32 %v308, 2.0
    %v313 = vadd.f32 %v309, 2.0
    %v314 = vadd.f32 %v310, 2.0
    %v315 = vadd.f32 %v311, 2.0
    %v316 = vpack.c.bf16 %v313, %v312
    %v317 = vpack.c.bf16 %v315, %v314
    %v318 = vunpack.c.l.bf16 %v316
    %v319 = vunpack.c.h.bf16 %v316
    %v320 = vunpack.c.l.bf16 %v317
    %v321 = vunpack.c.h.bf16 %v317
    %v322 = vmul.f32 %v308, %v318
    %v323 = vmul.f32 %v309, %v319
    %v324 = vmul.f32 %v310, %v320
    %v325 = vmul.f32 %v311, %v321
    %v326 = vpack.c.bf16 %v323, %v322
    %v327 = vpack.c.bf16 %v325, %v324
    %v328 = vunpack.c.l.bf16 %v326
    %v329 = vunpack.c.h.bf16 %v326
    %v330 = vunpack.c.l.bf16 %v327
    %v331 = vunpack.c.h.bf16 %v327
    %v332 = vadd.f32 %v328, 2.0
    %v333 = vadd.f32 %v329, 2.0
    %v334 = vadd.f32 %v330, 2.0
    %v335 = vadd.f32 %v331, 2.0
    %v336 = vrcp.pop %v332
    %v337 = vrcp.pop %v333
    %v338 = vrcp.pop %v334
    %v339 = vrcp.pop %v335
    %vm340 = vcmp.gt.f32.partialorder %v240, 20.0
    %vm341 = vcmp.gt.f32.partialorder %v253, 20.0
    %vm342 = vcmp.gt.f32.partialorder %v266, 20.0
    %vm343 = vcmp.gt.f32.partialorder %v279, 20.0
    %v344 = vmul.f32 %v240, %v328
    %v345 = vmul.f32 %v253, %v329
    %v346 = vmul.f32 %v266, %v330
    %v347 = vmul.f32 %v279, %v331
    %v348 = vmul.f32 %v344, %v336
    %v349 = vmul.f32 %v345, %v337
    %v350 = vmul.f32 %v346, %v338
    %v351 = vmul.f32 %v347, %v339
    %v352 = vsel %vm340, %v240, %v348
    %v353 = vsel %vm341, %v253, %v349
    %v354 = vsel %vm342, %v266, %v350
    %v355 = vsel %vm343, %v279, %v351
    %v356 = vpack.c.bf16 %v352, %v352
    %v357 = vpack.c.bf16 %v353, %v353
    %v358 = vpack.c.bf16 %v354, %v354
    %v359 = vpack.c.bf16 %v355, %v355
    %v360 = vld [vmem:[#allocation8] sm:$0xff]
    %v361 = vld [vmem:[#allocation8 + $0x8] sm:$0xff]
    %v362 = vld [vmem:[#allocation8 + $0x10] sm:$0xff]
    %v363 = vld [vmem:[#allocation8 + $0x18] sm:$0xff]
    %v364 = vld [vmem:[#allocation8 + $0x20] sm:$0xff]
    %v365 = vld [vmem:[#allocation8 + $0x28] sm:$0xff]
    %v366 = vld [vmem:[#allocation8 + $0x30] sm:$0xff]
    %v367 = vld [vmem:[#allocation8 + $0x38] sm:$0xff]
    %v368 = vld [vmem:[#allocation8 + $0x40] sm:$0xff]
    %v369 = vld [vmem:[#allocation8 + $0x48] sm:$0xff]
    %v370 = vld [vmem:[#allocation8 + $0x50] sm:$0xff]
    %v371 = vld [vmem:[#allocation8 + $0x58] sm:$0xff]
    %v372 = vld [vmem:[#allocation8 + $0x60] sm:$0xff]
    %v373 = vld [vmem:[#allocation8 + $0x68] sm:$0xff]
    %v374 = vld [vmem:[#allocation8 + $0x70] sm:$0xff]
    %v375 = vld [vmem:[#allocation8 + $0x78] sm:$0xff]
    %v376 = vld [vmem:[#allocation8 + $0x80] sm:$0xff]
    %v377 = vld [vmem:[#allocation8 + $0x88] sm:$0xff]
    %v378 = vld [vmem:[#allocation8 + $0x90] sm:$0xff]
    %v379 = vld [vmem:[#allocation8 + $0x98] sm:$0xff]
    %v380 = vld [vmem:[#allocation8 + $0xa0] sm:$0xff]
    %v381 = vld [vmem:[#allocation8 + $0xa8] sm:$0xff]
    %v382 = vld [vmem:[#allocation8 + $0xb0] sm:$0xff]
    %v383 = vld [vmem:[#allocation8 + $0xb8] sm:$0xff]
    %v384 = vld [vmem:[#allocation8 + $0xc0] sm:$0xff]
    %v385 = vld [vmem:[#allocation8 + $0xc8] sm:$0xff]
    %v386 = vld [vmem:[#allocation8 + $0xd0] sm:$0xff]
    %v387 = vld [vmem:[#allocation8 + $0xd8] sm:$0xff]
    %v388 = vld [vmem:[#allocation8 + $0xe0] sm:$0xff]
    %v389 = vld [vmem:[#allocation8 + $0xe8] sm:$0xff]
    %v390 = vld [vmem:[#allocation8 + $0xf0] sm:$0xff]
    %v391 = vld [vmem:[#allocation8 + $0xf8] sm:$0xff]
    %v392 = vld [vmem:[#allocation8 + $0x100] sm:$0xff]
    %v393 = vld [vmem:[#allocation8 + $0x108] sm:$0xff]
    %v394 = vld [vmem:[#allocation8 + $0x110] sm:$0xff]
    %v395 = vld [vmem:[#allocation8 + $0x118] sm:$0xff]
    %v396 = vld [vmem:[#allocation8 + $0x120] sm:$0xff]
    %v397 = vld [vmem:[#allocation8 + $0x128] sm:$0xff]
    %v398 = vld [vmem:[#allocation8 + $0x130] sm:$0xff]
    %v399 = vld [vmem:[#allocation8 + $0x138] sm:$0xff]
    %v400 = vld [vmem:[#allocation8 + $0x140] sm:$0xff]
    %v401 = vld [vmem:[#allocation8 + $0x148] sm:$0xff]
    %v402 = vld [vmem:[#allocation8 + $0x150] sm:$0xff]
    %v403 = vld [vmem:[#allocation8 + $0x158] sm:$0xff]
    %v404 = vld [vmem:[#allocation8 + $0x160] sm:$0xff]
    %v405 = vld [vmem:[#allocation8 + $0x168] sm:$0xff]
    %v406 = vld [vmem:[#allocation8 + $0x170] sm:$0xff]
    %v407 = vld [vmem:[#allocation8 + $0x178] sm:$0xff]
    %v408 = vld [vmem:[#allocation8 + $0x180] sm:$0xff]
    %v409 = vld [vmem:[#allocation8 + $0x188] sm:$0xff]
    %v410 = vld [vmem:[#allocation8 + $0x190] sm:$0xff]
    %v411 = vld [vmem:[#allocation8 + $0x198] sm:$0xff]
    %v412 = vld [vmem:[#allocation8 + $0x1a0] sm:$0xff]
    %v413 = vld [vmem:[#allocation8 + $0x1a8] sm:$0xff]
    %v414 = vld [vmem:[#allocation8 + $0x1b0] sm:$0xff]
    %v415 = vld [vmem:[#allocation8 + $0x1b8] sm:$0xff]
    %v416 = vld [vmem:[#allocation8 + $0x1c0] sm:$0xff]
    %v417 = vld [vmem:[#allocation8 + $0x1c8] sm:$0xff]
    %v418 = vld [vmem:[#allocation8 + $0x1d0] sm:$0xff]
    %v419 = vld [vmem:[#allocation8 + $0x1d8] sm:$0xff]
    %v420 = vld [vmem:[#allocation8 + $0x1e0] sm:$0xff]
    %v421 = vld [vmem:[#allocation8 + $0x1e8] sm:$0xff]
    %v422 = vld [vmem:[#allocation8 + $0x1f0] sm:$0xff]
    %v423 = vld [vmem:[#allocation8 + $0x1f8] sm:$0xff]
    %v424 = vld [vmem:[#allocation8 + $0x200] sm:$0xff]
    %v425 = vld [vmem:[#allocation8 + $0x208] sm:$0xff]
    %v426 = vld [vmem:[#allocation8 + $0x210] sm:$0xff]
    %v427 = vld [vmem:[#allocation8 + $0x218] sm:$0xff]
    %v428 = vld [vmem:[#allocation8 + $0x220] sm:$0xff]
    %v429 = vld [vmem:[#allocation8 + $0x228] sm:$0xff]
    %v430 = vld [vmem:[#allocation8 + $0x230] sm:$0xff]
    %v431 = vld [vmem:[#allocation8 + $0x238] sm:$0xff]
    %v432 = vld [vmem:[#allocation8 + $0x240] sm:$0xff]
    %v433 = vld [vmem:[#allocation8 + $0x248] sm:$0xff]
    %v434 = vld [vmem:[#allocation8 + $0x250] sm:$0xff]
    %v435 = vld [vmem:[#allocation8 + $0x258] sm:$0xff]
    %v436 = vld [vmem:[#allocation8 + $0x260] sm:$0xff]
    %v437 = vld [vmem:[#allocation8 + $0x268] sm:$0xff]
    %v438 = vld [vmem:[#allocation8 + $0x270] sm:$0xff]
    %v439 = vld [vmem:[#allocation8 + $0x278] sm:$0xff]
    %v440 = vld [vmem:[#allocation8 + $0x280] sm:$0xff]
    %v441 = vld [vmem:[#allocation8 + $0x288] sm:$0xff]
    %v442 = vld [vmem:[#allocation8 + $0x290] sm:$0xff]
    %v443 = vld [vmem:[#allocation8 + $0x298] sm:$0xff]
    %v444 = vld [vmem:[#allocation8 + $0x2a0] sm:$0xff]
    %v445 = vld [vmem:[#allocation8 + $0x2a8] sm:$0xff]
    %v446 = vld [vmem:[#allocation8 + $0x2b0] sm:$0xff]
    %v447 = vld [vmem:[#allocation8 + $0x2b8] sm:$0xff]
    %v448 = vld [vmem:[#allocation8 + $0x2c0] sm:$0xff]
    %v449 = vld [vmem:[#allocation8 + $0x2c8] sm:$0xff]
    %v450 = vld [vmem:[#allocation8 + $0x2d0] sm:$0xff]
    %v451 = vld [vmem:[#allocation8 + $0x2d8] sm:$0xff]
    %v452 = vld [vmem:[#allocation8 + $0x2e0] sm:$0xff]
    %v453 = vld [vmem:[#allocation8 + $0x2e8] sm:$0xff]
    %v454 = vld [vmem:[#allocation8 + $0x2f0] sm:$0xff]
    %v455 = vld [vmem:[#allocation8 + $0x2f8] sm:$0xff]
    %v456 = vld [vmem:[#allocation8 + $0x300] sm:$0xff]
    %v457 = vld [vmem:[#allocation8 + $0x308] sm:$0xff]
    %v458 = vld [vmem:[#allocation8 + $0x310] sm:$0xff]
    %v459 = vld [vmem:[#allocation8 + $0x318] sm:$0xff]
    %v460 = vld [vmem:[#allocation8 + $0x320] sm:$0xff]
    %v461 = vld [vmem:[#allocation8 + $0x328] sm:$0xff]
    %v462 = vld [vmem:[#allocation8 + $0x330] sm:$0xff]
    %v463 = vld [vmem:[#allocation8 + $0x338] sm:$0xff]
    %v464 = vld [vmem:[#allocation8 + $0x340] sm:$0xff]
    %v465 = vld [vmem:[#allocation8 + $0x348] sm:$0xff]
    %v466 = vld [vmem:[#allocation8 + $0x350] sm:$0xff]
    %v467 = vld [vmem:[#allocation8 + $0x358] sm:$0xff]
    %v468 = vld [vmem:[#allocation8 + $0x360] sm:$0xff]
    %v469 = vld [vmem:[#allocation8 + $0x368] sm:$0xff]
    %v470 = vld [vmem:[#allocation8 + $0x370] sm:$0xff]
    %v471 = vld [vmem:[#allocation8 + $0x378] sm:$0xff]
    %v472 = vld [vmem:[#allocation8 + $0x380] sm:$0xff]
    %v473 = vld [vmem:[#allocation8 + $0x388] sm:$0xff]
    %v474 = vld [vmem:[#allocation8 + $0x390] sm:$0xff]
    %v475 = vld [vmem:[#allocation8 + $0x398] sm:$0xff]
    %v476 = vld [vmem:[#allocation8 + $0x3a0] sm:$0xff]
    %v477 = vld [vmem:[#allocation8 + $0x3a8] sm:$0xff]
    %v478 = vld [vmem:[#allocation8 + $0x3b0] sm:$0xff]
    %v479 = vld [vmem:[#allocation8 + $0x3b8] sm:$0xff]
    %v480 = vld [vmem:[#allocation8 + $0x3c0] sm:$0xff]
    %v481 = vld [vmem:[#allocation8 + $0x3c8] sm:$0xff]
    %v482 = vld [vmem:[#allocation8 + $0x3d0] sm:$0xff]
    %v483 = vld [vmem:[#allocation8 + $0x3d8] sm:$0xff]
    %v484 = vld [vmem:[#allocation8 + $0x3e0] sm:$0xff]
    %v485 = vld [vmem:[#allocation8 + $0x3e8] sm:$0xff]
    %v486 = vld [vmem:[#allocation8 + $0x3f0] sm:$0xff]
    %v487 = vld [vmem:[#allocation8 + $0x3f8] sm:$0xff]
    %v488 = vld [vmem:[#allocation10] sm:$0xf]
    %v490 = vperm.slane %v488, 0
    %v491 = vperm.slane %v488, 1
    %v492 = vperm.slane %v488, 2
    %v493 = vperm.slane %v488, 3
    %v626 = vunpack.c.l.b16 %v360
    %v627 = vunpack.c.h.b16 %v360
    %v628 = vunpack.c.l.b16 %v361
    %v629 = vunpack.c.h.b16 %v361
    %v630 = vunpack.c.l.b16 %v362
    %v631 = vunpack.c.h.b16 %v362
    %v632 = vunpack.c.l.b16 %v363
    %v633 = vunpack.c.h.b16 %v363
    %v634 = vunpack.c.l.b16 %v364
    %v635 = vunpack.c.h.b16 %v364
    %v636 = vunpack.c.l.b16 %v365
    %v637 = vunpack.c.h.b16 %v365
    %v638 = vunpack.c.l.b16 %v366
    %v639 = vunpack.c.h.b16 %v366
    %v640 = vunpack.c.l.b16 %v367
    %v641 = vunpack.c.h.b16 %v367
    %v642 = vunpack.c.l.b16 %v368
    %v643 = vunpack.c.h.b16 %v368
    %v644 = vunpack.c.l.b16 %v369
    %v645 = vunpack.c.h.b16 %v369
    %v646 = vunpack.c.l.b16 %v370
    %v647 = vunpack.c.h.b16 %v370
    %v648 = vunpack.c.l.b16 %v371
    %v649 = vunpack.c.h.b16 %v371
    %v650 = vunpack.c.l.b16 %v372
    %v651 = vunpack.c.h.b16 %v372
    %v652 = vunpack.c.l.b16 %v373
    %v653 = vunpack.c.h.b16 %v373
    %v654 = vunpack.c.l.b16 %v374
    %v655 = vunpack.c.h.b16 %v374
    %v656 = vunpack.c.l.b16 %v375
    %v657 = vunpack.c.h.b16 %v375
    %v658 = vunpack.c.l.b16 %v376
    %v659 = vunpack.c.h.b16 %v376
    %v660 = vunpack.c.l.b16 %v377
    %v661 = vunpack.c.h.b16 %v377
    %v662 = vunpack.c.l.b16 %v378
    %v663 = vunpack.c.h.b16 %v378
    %v664 = vunpack.c.l.b16 %v379
    %v665 = vunpack.c.h.b16 %v379
    %v666 = vunpack.c.l.b16 %v380
    %v667 = vunpack.c.h.b16 %v380
    %v668 = vunpack.c.l.b16 %v381
    %v669 = vunpack.c.h.b16 %v381
    %v670 = vunpack.c.l.b16 %v382
    %v671 = vunpack.c.h.b16 %v382
    %v672 = vunpack.c.l.b16 %v383
    %v673 = vunpack.c.h.b16 %v383
    %v674 = vunpack.c.l.b16 %v384
    %v675 = vunpack.c.h.b16 %v384
    %v676 = vunpack.c.l.b16 %v385
    %v677 = vunpack.c.h.b16 %v385
    %v678 = vunpack.c.l.b16 %v386
    %v679 = vunpack.c.h.b16 %v386
    %v680 = vunpack.c.l.b16 %v387
    %v681 = vunpack.c.h.b16 %v387
    %v682 = vunpack.c.l.b16 %v388
    %v683 = vunpack.c.h.b16 %v388
    %v684 = vunpack.c.l.b16 %v389
    %v685 = vunpack.c.h.b16 %v389
    %v686 = vunpack.c.l.b16 %v390
    %v687 = vunpack.c.h.b16 %v390
    %v688 = vunpack.c.l.b16 %v391
    %v689 = vunpack.c.h.b16 %v391
    %v690 = vunpack.c.l.b16 %v392
    %v691 = vunpack.c.h.b16 %v392
    %v692 = vunpack.c.l.b16 %v393
    %v693 = vunpack.c.h.b16 %v393
    %v694 = vunpack.c.l.b16 %v394
    %v695 = vunpack.c.h.b16 %v394
    %v696 = vunpack.c.l.b16 %v395
    %v697 = vunpack.c.h.b16 %v395
    %v698 = vunpack.c.l.b16 %v396
    %v699 = vunpack.c.h.b16 %v396
    %v700 = vunpack.c.l.b16 %v397
    %v701 = vunpack.c.h.b16 %v397
    %v702 = vunpack.c.l.b16 %v398
    %v703 = vunpack.c.h.b16 %v398
    %v704 = vunpack.c.l.b16 %v399
    %v705 = vunpack.c.h.b16 %v399
    %v706 = vunpack.c.l.b16 %v400
    %v707 = vunpack.c.h.b16 %v400
    %v708 = vunpack.c.l.b16 %v401
    %v709 = vunpack.c.h.b16 %v401
    %v710 = vunpack.c.l.b16 %v402
    %v711 = vunpack.c.h.b16 %v402
    %v712 = vunpack.c.l.b16 %v403
    %v713 = vunpack.c.h.b16 %v403
    %v714 = vunpack.c.l.b16 %v404
    %v715 = vunpack.c.h.b16 %v404
    %v716 = vunpack.c.l.b16 %v405
    %v717 = vunpack.c.h.b16 %v405
    %v718 = vunpack.c.l.b16 %v406
    %v719 = vunpack.c.h.b16 %v406
    %v720 = vunpack.c.l.b16 %v407
    %v721 = vunpack.c.h.b16 %v407
    %v722 = vunpack.c.l.b16 %v408
    %v723 = vunpack.c.h.b16 %v408
    %v724 = vunpack.c.l.b16 %v409
    %v725 = vunpack.c.h.b16 %v409
    %v726 = vunpack.c.l.b16 %v410
    %v727 = vunpack.c.h.b16 %v410
    %v728 = vunpack.c.l.b16 %v411
    %v729 = vunpack.c.h.b16 %v411
    %v730 = vunpack.c.l.b16 %v412
    %v731 = vunpack.c.h.b16 %v412
    %v732 = vunpack.c.l.b16 %v413
    %v733 = vunpack.c.h.b16 %v413
    %v734 = vunpack.c.l.b16 %v414
    %v735 = vunpack.c.h.b16 %v414
    %v736 = vunpack.c.l.b16 %v415
    %v737 = vunpack.c.h.b16 %v415
    %v738 = vunpack.c.l.b16 %v416
    %v739 = vunpack.c.h.b16 %v416
    %v740 = vunpack.c.l.b16 %v417
    %v741 = vunpack.c.h.b16 %v417
    %v742 = vunpack.c.l.b16 %v418
    %v743 = vunpack.c.h.b16 %v418
    %v744 = vunpack.c.l.b16 %v419
    %v745 = vunpack.c.h.b16 %v419
    %v746 = vunpack.c.l.b16 %v420
    %v747 = vunpack.c.h.b16 %v420
    %v748 = vunpack.c.l.b16 %v421
    %v749 = vunpack.c.h.b16 %v421
    %v750 = vunpack.c.l.b16 %v422
    %v751 = vunpack.c.h.b16 %v422
    %v752 = vunpack.c.l.b16 %v423
    %v753 = vunpack.c.h.b16 %v423
    %v754 = vunpack.c.l.b16 %v424
    %v755 = vunpack.c.h.b16 %v424
    %v756 = vunpack.c.l.b16 %v425
    %v757 = vunpack.c.h.b16 %v425
    %v758 = vunpack.c.l.b16 %v426
    %v759 = vunpack.c.h.b16 %v426
    %v760 = vunpack.c.l.b16 %v427
    %v761 = vunpack.c.h.b16 %v427
    %v762 = vunpack.c.l.b16 %v428
    %v763 = vunpack.c.h.b16 %v428
    %v764 = vunpack.c.l.b16 %v429
    %v765 = vunpack.c.h.b16 %v429
    %v766 = vunpack.c.l.b16 %v430
    %v767 = vunpack.c.h.b16 %v430
    %v768 = vunpack.c.l.b16 %v431
    %v769 = vunpack.c.h.b16 %v431
    %v770 = vunpack.c.l.b16 %v432
    %v771 = vunpack.c.h.b16 %v432
    %v772 = vunpack.c.l.b16 %v433
    %v773 = vunpack.c.h.b16 %v433
    %v774 = vunpack.c.l.b16 %v434
    %v775 = vunpack.c.h.b16 %v434
    %v776 = vunpack.c.l.b16 %v435
    %v777 = vunpack.c.h.b16 %v435
    %v778 = vunpack.c.l.b16 %v436
    %v779 = vunpack.c.h.b16 %v436
    %v780 = vunpack.c.l.b16 %v437
    %v781 = vunpack.c.h.b16 %v437
    %v782 = vunpack.c.l.b16 %v438
    %v783 = vunpack.c.h.b16 %v438
    %v784 = vunpack.c.l.b16 %v439
    %v785 = vunpack.c.h.b16 %v439
    %v786 = vunpack.c.l.b16 %v440
    %v787 = vunpack.c.h.b16 %v440
    %v788 = vunpack.c.l.b16 %v441
    %v789 = vunpack.c.h.b16 %v441
    %v790 = vunpack.c.l.b16 %v442
    %v791 = vunpack.c.h.b16 %v442
    %v792 = vunpack.c.l.b16 %v443
    %v793 = vunpack.c.h.b16 %v443
    %v794 = vunpack.c.l.b16 %v444
    %v795 = vunpack.c.h.b16 %v444
    %v796 = vunpack.c.l.b16 %v445
    %v797 = vunpack.c.h.b16 %v445
    %v798 = vunpack.c.l.b16 %v446
    %v799 = vunpack.c.h.b16 %v446
    %v800 = vunpack.c.l.b16 %v447
    %v801 = vunpack.c.h.b16 %v447
    %v802 = vunpack.c.l.b16 %v448
    %v803 = vunpack.c.h.b16 %v448
    %v804 = vunpack.c.l.b16 %v449
    %v805 = vunpack.c.h.b16 %v449
    %v806 = vunpack.c.l.b16 %v450
    %v807 = vunpack.c.h.b16 %v450
    %v808 = vunpack.c.l.b16 %v451
    %v809 = vunpack.c.h.b16 %v451
    %v810 = vunpack.c.l.b16 %v452
    %v811 = vunpack.c.h.b16 %v452
    %v812 = vunpack.c.l.b16 %v453
    %v813 = vunpack.c.h.b16 %v453
    %v814 = vunpack.c.l.b16 %v454
    %v815 = vunpack.c.h.b16 %v454
    %v816 = vunpack.c.l.b16 %v455
    %v817 = vunpack.c.h.b16 %v455
    %v818 = vunpack.c.l.b16 %v456
    %v819 = vunpack.c.h.b16 %v456
    %v820 = vunpack.c.l.b16 %v457
    %v821 = vunpack.c.h.b16 %v457
    %v822 = vunpack.c.l.b16 %v458
    %v823 = vunpack.c.h.b16 %v458
    %v824 = vunpack.c.l.b16 %v459
    %v825 = vunpack.c.h.b16 %v459
    %v826 = vunpack.c.l.b16 %v460
    %v827 = vunpack.c.h.b16 %v460
    %v828 = vunpack.c.l.b16 %v461
    %v829 = vunpack.c.h.b16 %v461
    %v830 = vunpack.c.l.b16 %v462
    %v831 = vunpack.c.h.b16 %v462
    %v832 = vunpack.c.l.b16 %v463
    %v833 = vunpack.c.h.b16 %v463
    %v834 = vunpack.c.l.b16 %v464
    %v835 = vunpack.c.h.b16 %v464
    %v836 = vunpack.c.l.b16 %v465
    %v837 = vunpack.c.h.b16 %v465
    %v838 = vunpack.c.l.b16 %v466
    %v839 = vunpack.c.h.b16 %v466
    %v840 = vunpack.c.l.b16 %v467
    %v841 = vunpack.c.h.b16 %v467
    %v842 = vunpack.c.l.b16 %v468
    %v843 = vunpack.c.h.b16 %v468
    %v844 = vunpack.c.l.b16 %v469
    %v845 = vunpack.c.h.b16 %v469
    %v846 = vunpack.c.l.b16 %v470
    %v847 = vunpack.c.h.b16 %v470
    %v848 = vunpack.c.l.b16 %v471
    %v849 = vunpack.c.h.b16 %v471
    %v850 = vunpack.c.l.b16 %v472
    %v851 = vunpack.c.h.b16 %v472
    %v852 = vunpack.c.l.b16 %v473
    %v853 = vunpack.c.h.b16 %v473
    %v854 = vunpack.c.l.b16 %v474
    %v855 = vunpack.c.h.b16 %v474
    %v856 = vunpack.c.l.b16 %v475
    %v857 = vunpack.c.h.b16 %v475
    %v858 = vunpack.c.l.b16 %v476
    %v859 = vunpack.c.h.b16 %v476
    %v860 = vunpack.c.l.b16 %v477
    %v861 = vunpack.c.h.b16 %v477
    %v862 = vunpack.c.l.b16 %v478
    %v863 = vunpack.c.h.b16 %v478
    %v864 = vunpack.c.l.b16 %v479
    %v865 = vunpack.c.h.b16 %v479
    %v866 = vunpack.c.l.b16 %v480
    %v867 = vunpack.c.h.b16 %v480
    %v868 = vunpack.c.l.b16 %v481
    %v869 = vunpack.c.h.b16 %v481
    %v870 = vunpack.c.l.b16 %v482
    %v871 = vunpack.c.h.b16 %v482
    %v872 = vunpack.c.l.b16 %v483
    %v873 = vunpack.c.h.b16 %v483
    %v874 = vunpack.c.l.b16 %v484
    %v875 = vunpack.c.h.b16 %v484
    %v876 = vunpack.c.l.b16 %v485
    %v877 = vunpack.c.h.b16 %v485
    %v878 = vunpack.c.l.b16 %v486
    %v879 = vunpack.c.h.b16 %v486
    %v880 = vunpack.c.l.b16 %v487
    %v881 = vunpack.c.h.b16 %v487
    %v882 = vpack.c.b16 %v630, %v626
    %v883 = vpack.c.b16 %v631, %v627
    %v884 = vpack.c.b16 %v632, %v628
    %v885 = vpack.c.b16 %v633, %v629
    %v886 = vpack.c.b16 %v638, %v634
    %v887 = vpack.c.b16 %v639, %v635
    %v888 = vpack.c.b16 %v640, %v636
    %v889 = vpack.c.b16 %v641, %v637
    %v890 = vpack.c.b16 %v646, %v642
    %v891 = vpack.c.b16 %v647, %v643
    %v892 = vpack.c.b16 %v648, %v644
    %v893 = vpack.c.b16 %v649, %v645
    %v894 = vpack.c.b16 %v654, %v650
    %v895 = vpack.c.b16 %v655, %v651
    %v896 = vpack.c.b16 %v656, %v652
    %v897 = vpack.c.b16 %v657, %v653
    %v898 = vpack.c.b16 %v662, %v658
    %v899 = vpack.c.b16 %v663, %v659
    %v900 = vpack.c.b16 %v664, %v660
    %v901 = vpack.c.b16 %v665, %v661
    %v902 = vpack.c.b16 %v670, %v666
    %v903 = vpack.c.b16 %v671, %v667
    %v904 = vpack.c.b16 %v672, %v668
    %v905 = vpack.c.b16 %v673, %v669
    %v906 = vpack.c.b16 %v678, %v674
    %v907 = vpack.c.b16 %v679, %v675
    %v908 = vpack.c.b16 %v680, %v676
    %v909 = vpack.c.b16 %v681, %v677
    %v910 = vpack.c.b16 %v686, %v682
    %v911 = vpack.c.b16 %v687, %v683
    %v912 = vpack.c.b16 %v688, %v684
    %v913 = vpack.c.b16 %v689, %v685
    %v914 = vpack.c.b16 %v694, %v690
    %v915 = vpack.c.b16 %v695, %v691
    %v916 = vpack.c.b16 %v696, %v692
    %v917 = vpack.c.b16 %v697, %v693
    %v918 = vpack.c.b16 %v702, %v698
    %v919 = vpack.c.b16 %v703, %v699
    %v920 = vpack.c.b16 %v704, %v700
    %v921 = vpack.c.b16 %v705, %v701
    %v922 = vpack.c.b16 %v710, %v706
    %v923 = vpack.c.b16 %v711, %v707
    %v924 = vpack.c.b16 %v712, %v708
    %v925 = vpack.c.b16 %v713, %v709
    %v926 = vpack.c.b16 %v718, %v714
    %v927 = vpack.c.b16 %v719, %v715
    %v928 = vpack.c.b16 %v720, %v716
    %v929 = vpack.c.b16 %v721, %v717
    %v930 = vpack.c.b16 %v726, %v722
    %v931 = vpack.c.b16 %v727, %v723
    %v932 = vpack.c.b16 %v728, %v724
    %v933 = vpack.c.b16 %v729, %v725
    %v934 = vpack.c.b16 %v734, %v730
    %v935 = vpack.c.b16 %v735, %v731
    %v936 = vpack.c.b16 %v736, %v732
    %v937 = vpack.c.b16 %v737, %v733
    %v938 = vpack.c.b16 %v742, %v738
    %v939 = vpack.c.b16 %v743, %v739
    %v940 = vpack.c.b16 %v744, %v740
    %v941 = vpack.c.b16 %v745, %v741
    %v942 = vpack.c.b16 %v750, %v746
    %v943 = vpack.c.b16 %v751, %v747
    %v944 = vpack.c.b16 %v752, %v748
    %v945 = vpack.c.b16 %v753, %v749
    %v946 = vpack.c.b16 %v758, %v754
    %v947 = vpack.c.b16 %v759, %v755
    %v948 = vpack.c.b16 %v760, %v756
    %v949 = vpack.c.b16 %v761, %v757
    %v950 = vpack.c.b16 %v766, %v762
    %v951 = vpack.c.b16 %v767, %v763
    %v952 = vpack.c.b16 %v768, %v764
    %v953 = vpack.c.b16 %v769, %v765
    %v954 = vpack.c.b16 %v774, %v770
    %v955 = vpack.c.b16 %v775, %v771
    %v956 = vpack.c.b16 %v776, %v772
    %v957 = vpack.c.b16 %v777, %v773
    %v958 = vpack.c.b16 %v782, %v778
    %v959 = vpack.c.b16 %v783, %v779
    %v960 = vpack.c.b16 %v784, %v780
    %v961 = vpack.c.b16 %v785, %v781
    %v962 = vpack.c.b16 %v790, %v786
    %v963 = vpack.c.b16 %v791, %v787
    %v964 = vpack.c.b16 %v792, %v788
    %v965 = vpack.c.b16 %v793, %v789
    %v966 = vpack.c.b16 %v798, %v794
    %v967 = vpack.c.b16 %v799, %v795
    %v968 = vpack.c.b16 %v800, %v796
    %v969 = vpack.c.b16 %v801, %v797
    %v970 = vpack.c.b16 %v806, %v802
    %v971 = vpack.c.b16 %v807, %v803
    %v972 = vpack.c.b16 %v808, %v804
    %v973 = vpack.c.b16 %v809, %v805
    %v974 = vpack.c.b16 %v814, %v810
    %v975 = vpack.c.b16 %v815, %v811
    %v976 = vpack.c.b16 %v816, %v812
    %v977 = vpack.c.b16 %v817, %v813
    %v978 = vpack.c.b16 %v822, %v818
    %v979 = vpack.c.b16 %v823, %v819
    %v980 = vpack.c.b16 %v824, %v820
    %v981 = vpack.c.b16 %v825, %v821
    %v982 = vpack.c.b16 %v830, %v826
    %v983 = vpack.c.b16 %v831, %v827
    %v984 = vpack.c.b16 %v832, %v828
    %v985 = vpack.c.b16 %v833, %v829
    %v986 = vpack.c.b16 %v838, %v834
    %v987 = vpack.c.b16 %v839, %v835
    %v988 = vpack.c.b16 %v840, %v836
    %v989 = vpack.c.b16 %v841, %v837
    %v990 = vpack.c.b16 %v846, %v842
    %v991 = vpack.c.b16 %v847, %v843
    %v992 = vpack.c.b16 %v848, %v844
    %v993 = vpack.c.b16 %v849, %v845
    %v994 = vpack.c.b16 %v854, %v850
    %v995 = vpack.c.b16 %v855, %v851
    %v996 = vpack.c.b16 %v856, %v852
    %v997 = vpack.c.b16 %v857, %v853
    %v998 = vpack.c.b16 %v862, %v858
    %v999 = vpack.c.b16 %v863, %v859
    %v1000 = vpack.c.b16 %v864, %v860
    %v1001 = vpack.c.b16 %v865, %v861
    %v1002 = vpack.c.b16 %v870, %v866
    %v1003 = vpack.c.b16 %v871, %v867
    %v1004 = vpack.c.b16 %v872, %v868
    %v1005 = vpack.c.b16 %v873, %v869
    %v1006 = vpack.c.b16 %v878, %v874
    %v1007 = vpack.c.b16 %v879, %v875
    %v1008 = vpack.c.b16 %v880, %v876
    %v1009 = vpack.c.b16 %v881, %v877
    %1138 = vmatpush.bf16.msra.mxu0 %v910
    %1139 = vmatpush.bf16.msra.mxu0 %v906
    %1140 = vmatpush.bf16.msra.mxu0 %v902
    %1141 = vmatpush.bf16.msra.mxu0 %v898
    %1142 = vmatpush.bf16.msra.mxu0 %v894
    %1143 = vmatpush.bf16.msra.mxu0 %v890
    %1144 = vmatpush.bf16.msra.mxu0 %v886
    %1145 = vmatpush.bf16.msra.mxu0 %v882
    %1146 = vmatmul.bf16.gmra.mxu0 %v356
    %v1147 = vpop.f32.mrf.mxu0
    %v1148 = vadd.f32 %v490, %v1147
    %v1149 = vpop.f32.mrf.mxu0
    %1150 = vdwg.mxu0
    %1151 = vmatpush.bf16.msra.mxu0 %v942
    %1152 = vmatpush.bf16.msra.mxu0 %v938
    %1153 = vmatpush.bf16.msra.mxu0 %v934
    %1154 = vmatpush.bf16.msra.mxu0 %v930
    %1155 = vmatpush.bf16.msra.mxu0 %v926
    %1156 = vmatpush.bf16.msra.mxu0 %v922
    %1157 = vmatpush.bf16.msra.mxu0 %v918
    %1158 = vmatpush.bf16.msra.mxu0 %v914
    %1159 = vmatmul.bf16.gmra.mxu0 %v357
    %v1160 = vpop.f32.mrf.mxu0
    %v1161 = vadd.f32 %v1148, %v1160
    %v1162 = vpop.f32.mrf.mxu0
    %1163 = vdwg.mxu0
    %1164 = vmatpush.bf16.msra.mxu0 %v974
    %1165 = vmatpush.bf16.msra.mxu0 %v970
    %1166 = vmatpush.bf16.msra.mxu0 %v966
    %1167 = vmatpush.bf16.msra.mxu0 %v962
    %1168 = vmatpush.bf16.msra.mxu0 %v958
    %1169 = vmatpush.bf16.msra.mxu0 %v954
    %1170 = vmatpush.bf16.msra.mxu0 %v950
    %1171 = vmatpush.bf16.msra.mxu0 %v946
    %1172 = vmatmul.bf16.gmra.mxu0 %v358
    %v1173 = vpop.f32.mrf.mxu0
    %v1174 = vadd.f32 %v1161, %v1173
    %v1175 = vpop.f32.mrf.mxu0
    %1176 = vdwg.mxu0
    %1177 = vmatpush.bf16.msra.mxu0 %v1006
    %1178 = vmatpush.bf16.msra.mxu0 %v1002
    %1179 = vmatpush.bf16.msra.mxu0 %v998
    %1180 = vmatpush.bf16.msra.mxu0 %v994
    %1181 = vmatpush.bf16.msra.mxu0 %v990
    %1182 = vmatpush.bf16.msra.mxu0 %v986
    %1183 = vmatpush.bf16.msra.mxu0 %v982
    %1184 = vmatpush.bf16.msra.mxu0 %v978
    %1185 = vmatmul.bf16.gmra.mxu0 %v359
    %v1186 = vpop.f32.mrf.mxu0
    %v1187 = vadd.f32 %v1174, %v1186
    %v1188 = vpop.f32.mrf.mxu0
    %1189 = vdwg.mxu0
    %1190 = vmatpush.bf16.msra.mxu0 %v911
    %1191 = vmatpush.bf16.msra.mxu0 %v907
    %1192 = vmatpush.bf16.msra.mxu0 %v903
    %1193 = vmatpush.bf16.msra.mxu0 %v899
    %1194 = vmatpush.bf16.msra.mxu0 %v895
    %1195 = vmatpush.bf16.msra.mxu0 %v891
    %1196 = vmatpush.bf16.msra.mxu0 %v887
    %1197 = vmatpush.bf16.msra.mxu0 %v883
    %1198 = vmatmul.bf16.gmra.mxu0 %v356
    %v1199 = vpop.f32.mrf.mxu0
    %v1200 = vadd.f32 %v491, %v1199
    %v1201 = vpop.f32.mrf.mxu0
    %1202 = vdwg.mxu0
    %1203 = vmatpush.bf16.msra.mxu0 %v943
    %1204 = vmatpush.bf16.msra.mxu0 %v939
    %1205 = vmatpush.bf16.msra.mxu0 %v935
    %1206 = vmatpush.bf16.msra.mxu0 %v931
    %1207 = vmatpush.bf16.msra.mxu0 %v927
    %1208 = vmatpush.bf16.msra.mxu0 %v923
    %1209 = vmatpush.bf16.msra.mxu0 %v919
    %1210 = vmatpush.bf16.msra.mxu0 %v915
    %1211 = vmatmul.bf16.gmra.mxu0 %v357
    %v1212 = vpop.f32.mrf.mxu0
    %v1213 = vadd.f32 %v1200, %v1212
    %v1214 = vpop.f32.mrf.mxu0
    %1215 = vdwg.mxu0
    %1216 = vmatpush.bf16.msra.mxu0 %v975
    %1217 = vmatpush.bf16.msra.mxu0 %v971
    %1218 = vmatpush.bf16.msra.mxu0 %v967
    %1219 = vmatpush.bf16.msra.mxu0 %v963
    %1220 = vmatpush.bf16.msra.mxu0 %v959
    %1221 = vmatpush.bf16.msra.mxu0 %v955
    %1222 = vmatpush.bf16.msra.mxu0 %v951
    %1223 = vmatpush.bf16.msra.mxu0 %v947
    %1224 = vmatmul.bf16.gmra.mxu0 %v358
    %v1225 = vpop.f32.mrf.mxu0
    %v1226 = vadd.f32 %v1213, %v1225
    %v1227 = vpop.f32.mrf.mxu0
    %1228 = vdwg.mxu0
    %1229 = vmatpush.bf16.msra.mxu0 %v1007
    %1230 = vmatpush.bf16.msra.mxu0 %v1003
    %1231 = vmatpush.bf16.msra.mxu0 %v999
    %1232 = vmatpush.bf16.msra.mxu0 %v995
    %1233 = vmatpush.bf16.msra.mxu0 %v991
    %1234 = vmatpush.bf16.msra.mxu0 %v987
    %1235 = vmatpush.bf16.msra.mxu0 %v983
    %1236 = vmatpush.bf16.msra.mxu0 %v979
    %1237 = vmatmul.bf16.gmra.mxu0 %v359
    %v1238 = vpop.f32.mrf.mxu0
    %v1239 = vadd.f32 %v1226, %v1238
    %v1240 = vpop.f32.mrf.mxu0
    %1241 = vdwg.mxu0
    %1242 = vmatpush.bf16.msra.mxu0 %v912
    %1243 = vmatpush.bf16.msra.mxu0 %v908
    %1244 = vmatpush.bf16.msra.mxu0 %v904
    %1245 = vmatpush.bf16.msra.mxu0 %v900
    %1246 = vmatpush.bf16.msra.mxu0 %v896
    %1247 = vmatpush.bf16.msra.mxu0 %v892
    %1248 = vmatpush.bf16.msra.mxu0 %v888
    %1249 = vmatpush.bf16.msra.mxu0 %v884
    %1250 = vmatmul.bf16.gmra.mxu0 %v356
    %v1251 = vpop.f32.mrf.mxu0
    %v1252 = vadd.f32 %v492, %v1251
    %v1253 = vpop.f32.mrf.mxu0
    %1254 = vdwg.mxu0
    %1255 = vmatpush.bf16.msra.mxu0 %v944
    %1256 = vmatpush.bf16.msra.mxu0 %v940
    %1257 = vmatpush.bf16.msra.mxu0 %v936
    %1258 = vmatpush.bf16.msra.mxu0 %v932
    %1259 = vmatpush.bf16.msra.mxu0 %v928
    %1260 = vmatpush.bf16.msra.mxu0 %v924
    %1261 = vmatpush.bf16.msra.mxu0 %v920
    %1262 = vmatpush.bf16.msra.mxu0 %v916
    %1263 = vmatmul.bf16.gmra.mxu0 %v357
    %v1264 = vpop.f32.mrf.mxu0
    %v1265 = vadd.f32 %v1252, %v1264
    %v1266 = vpop.f32.mrf.mxu0
    %1267 = vdwg.mxu0
    %1268 = vmatpush.bf16.msra.mxu0 %v976
    %1269 = vmatpush.bf16.msra.mxu0 %v972
    %1270 = vmatpush.bf16.msra.mxu0 %v968
    %1271 = vmatpush.bf16.msra.mxu0 %v964
    %1272 = vmatpush.bf16.msra.mxu0 %v960
    %1273 = vmatpush.bf16.msra.mxu0 %v956
    %1274 = vmatpush.bf16.msra.mxu0 %v952
    %1275 = vmatpush.bf16.msra.mxu0 %v948
    %1276 = vmatmul.bf16.gmra.mxu0 %v358
    %v1277 = vpop.f32.mrf.mxu0
    %v1278 = vadd.f32 %v1265, %v1277
    %v1279 = vpop.f32.mrf.mxu0
    %1280 = vdwg.mxu0
    %1281 = vmatpush.bf16.msra.mxu0 %v1008
    %1282 = vmatpush.bf16.msra.mxu0 %v1004
    %1283 = vmatpush.bf16.msra.mxu0 %v1000
    %1284 = vmatpush.bf16.msra.mxu0 %v996
    %1285 = vmatpush.bf16.msra.mxu0 %v992
    %1286 = vmatpush.bf16.msra.mxu0 %v988
    %1287 = vmatpush.bf16.msra.mxu0 %v984
    %1288 = vmatpush.bf16.msra.mxu0 %v980
    %1289 = vmatmul.bf16.gmra.mxu0 %v359
    %v1290 = vpop.f32.mrf.mxu0
    %v1291 = vadd.f32 %v1278, %v1290
    %v1292 = vpop.f32.mrf.mxu0
    %1293 = vdwg.mxu0
    %1294 = vmatpush.bf16.msra.mxu0 %v913
    %1295 = vmatpush.bf16.msra.mxu0 %v909
    %1296 = vmatpush.bf16.msra.mxu0 %v905
    %1297 = vmatpush.bf16.msra.mxu0 %v901
    %1298 = vmatpush.bf16.msra.mxu0 %v897
    %1299 = vmatpush.bf16.msra.mxu0 %v893
    %1300 = vmatpush.bf16.msra.mxu0 %v889
    %1301 = vmatpush.bf16.msra.mxu0 %v885
    %1302 = vmatmul.bf16.gmra.mxu0 %v356
    %v1303 = vpop.f32.mrf.mxu0
    %v1304 = vadd.f32 %v493, %v1303
    %v1305 = vpop.f32.mrf.mxu0
    %1306 = vdwg.mxu0
    %1307 = vmatpush.bf16.msra.mxu0 %v945
    %1308 = vmatpush.bf16.msra.mxu0 %v941
    %1309 = vmatpush.bf16.msra.mxu0 %v937
    %1310 = vmatpush.bf16.msra.mxu0 %v933
    %1311 = vmatpush.bf16.msra.mxu0 %v929
    %1312 = vmatpush.bf16.msra.mxu0 %v925
    %1313 = vmatpush.bf16.msra.mxu0 %v921
    %1314 = vmatpush.bf16.msra.mxu0 %v917
    %1315 = vmatmul.bf16.gmra.mxu0 %v357
    %v1316 = vpop.f32.mrf.mxu0
    %v1317 = vadd.f32 %v1304, %v1316
    %v1318 = vpop.f32.mrf.mxu0
    %1319 = vdwg.mxu0
    %1320 = vmatpush.bf16.msra.mxu0 %v977
    %1321 = vmatpush.bf16.msra.mxu0 %v973
    %1322 = vmatpush.bf16.msra.mxu0 %v969
    %1323 = vmatpush.bf16.msra.mxu0 %v965
    %1324 = vmatpush.bf16.msra.mxu0 %v961
    %1325 = vmatpush.bf16.msra.mxu0 %v957
    %1326 = vmatpush.bf16.msra.mxu0 %v953
    %1327 = vmatpush.bf16.msra.mxu0 %v949
    %1328 = vmatmul.bf16.gmra.mxu0 %v358
    %v1329 = vpop.f32.mrf.mxu0
    %v1330 = vadd.f32 %v1317, %v1329
    %v1331 = vpop.f32.mrf.mxu0
    %1332 = vdwg.mxu0
    %1333 = vmatpush.bf16.msra.mxu0 %v1009
    %1334 = vmatpush.bf16.msra.mxu0 %v1005
    %1335 = vmatpush.bf16.msra.mxu0 %v1001
    %1336 = vmatpush.bf16.msra.mxu0 %v997
    %1337 = vmatpush.bf16.msra.mxu0 %v993
    %1338 = vmatpush.bf16.msra.mxu0 %v989
    %1339 = vmatpush.bf16.msra.mxu0 %v985
    %1340 = vmatpush.bf16.msra.mxu0 %v981
    %1341 = vmatmul.bf16.gmra.mxu0 %v359
    %v1342 = vpop.f32.mrf.mxu0
    %v1343 = vadd.f32 %v1330, %v1342
    %v1344 = vpop.f32.mrf.mxu0
    %1345 = vdwg.mxu0
    %v1350 = vrot.slane %v1239, 6
    %v1351 = vrot.slane %v1291, 4
    %v1352 = vrot.slane %v1343, 2
    %vm1353 = vcmask 1041408
    %v1354 = vsel %vm1353, %v1187, %v1350
    %vm1355 = vcmask 1045508
    %v1356 = vsel %vm1355, %v1351, %v1352
    %vm1357 = vcmask 1043456
    %v1358 = vsel %vm1357, %v1354, %v1356
    %1360 = vst [vmem:[#allocation11] sm:$0xff] %v1358
    // Predicated region
    $region42: #{_feature_projector_impl.1} parent=1 // pred_check
      _
    $region43: #{_feature_projector_impl.1} parent=1 // pred_check_branch
      %1362 = sbr.rel (0) target = $region45
    $region44: #{_feature_projector_impl.1} parent=1 // pred_region
      %1364 = vsyncadd [#allocation4], 0
      %s1366 = sshll.u32 [#allocation11], 4
      %s1367 = int_to_ptr.vmem [resolvable:$true] %s1366
      %s1368 = sshll.u32 %s5, 4
      %s1369 = int_to_ptr.hbm [resolvable:$true] %s1368
      %1371 = dma.vmem_to_hbm [thread:$0]  %s1367, 128, %s1369, [#allocation4]
    $region45: #{_feature_projector_impl.1} parent=1 // pred_fallthru
      _
    // Predicated region
    $region46: #{_feature_projector_impl.1} parent=1 // pred_check
      _
    $region47: #{_feature_projector_impl.1} parent=1 // pred_check_branch
      %1373 = sbr.rel (0) target = $region49
    $region48: #{_feature_projector_impl.1} parent=1 // pred_region
      %1375 = dma.done [#allocation4], 128
    $region49: #{_feature_projector_impl.1} parent=1 // pred_fallthru
      _
    %1376 = vsyncpa [#allocation3], 1
    %1377 = vsyncpa [#allocation6], 1
    %1378 = vsyncpa [#allocation9], 1
    %1379 = vsyncpa [#allocation4], 1

</llo_original>
